<compile_context>
chip_gen: v6e
topology: v6e:2x2x1
jax: 0.10.0
libtpu: 0.0.40
codegen_flags: <defaults>
</compile_context>

<pallas_src>
import functools

import jax
import jax.numpy as jnp
from jax.experimental import pallas as pl
from jax.experimental.pallas import tpu as pltpu

BN_EPS = 1e-5


def _match_affine_kernel(x_ref, b_ref, bm_ref, waff_ref, ba_ref,
                         z_ref, stats_ref, xs_ref):
    """Fused 3x3 Match conv + shared 1x1 conv; emits per-tile BN partial sums.

    x_ref    : (1, H, W*C)   f32  un-padded image of batch n, lane-flattened NHWC
    b_ref    : (3, W*C, W*C)      banded Match weights (one per ky); dx shifts and
                                  the width halo are folded into the band
    bm_ref   : (1, W*C)      f32  Match bias tiled over W
    waff_ref : (W*C, W*C)         kron(I_W, kron(I_split, wa))  (shared 1x1 conv)
    ba_ref   : (1, W*C)      f32  1x1 bias tiled over chunks and W
    z_ref    : (1, TH, W*C)  f32  pre-BN activations (output tile)
    stats_ref: (1, 1, 2, W*C) f32 per-tile [sum, sum_sq] partials (wrapper reduces)
    xs_ref   : (TH+2, W*C)   f32  VMEM scratch: row-haloed window, zero at edges
    """
    h = pl.program_id(1)
    nh = pl.num_programs(1)
    _, TH, WC = z_ref.shape
    row0 = pl.multiple_of(h * TH, TH)

    # Row halo handled in-kernel (no wrapper-side pad HBM round trip):
    # xs[r] = x[row0 + r - 1], zero-filled at the image edges.
    xs_ref[pl.ds(1, TH), :] = x_ref[0, pl.ds(row0, TH), :]

    @pl.when(h == 0)
    def _():
        xs_ref[0:1, :] = jnp.zeros((1, WC), jnp.float32)

    @pl.when(h > 0)
    def _():
        xs_ref[0:1, :] = x_ref[0, pl.ds(row0 - 1, 1), :]

    @pl.when(h == nh - 1)
    def _():
        xs_ref[TH + 1:TH + 2, :] = jnp.zeros((1, WC), jnp.float32)

    @pl.when(h < nh - 1)
    def _():
        xs_ref[TH + 1:TH + 2, :] = x_ref[0, pl.ds(row0 + TH, 1), :]

    # 3x3 Match conv = three row-aligned, lane-dense matmuls (MXU, f32 acc).
    mdt = b_ref.dtype
    y = jnp.dot(xs_ref[pl.ds(0, TH), :].astype(mdt), b_ref[0],
                preferred_element_type=jnp.float32)
    y = y + jnp.dot(xs_ref[pl.ds(1, TH), :].astype(mdt), b_ref[1],
                    preferred_element_type=jnp.float32)
    y = y + jnp.dot(xs_ref[pl.ds(2, TH), :].astype(mdt), b_ref[2],
                    preferred_element_type=jnp.float32)
    y = y + bm_ref[...]

    # Shared 1x1 conv on every chunk at once via the block-diagonal weight.
    z = jnp.dot(y.astype(waff_ref.dtype), waff_ref[...],
                preferred_element_type=jnp.float32) + ba_ref[...]

    z_ref[0] = z                                          # single lane-dense store

    # Per-tile BN partial sums (no cross-h carry -> both grid axes "parallel").
    stats_ref[0, 0, 0:1, :] = jnp.sum(z, axis=0, keepdims=True)
    stats_ref[0, 0, 1:2, :] = jnp.sum(z * z, axis=0, keepdims=True)


def _pick_row_tile(H):
    """Whole image per tile when it fits (maximizes MXU M-dim occupancy and
    amortizes per-grid-step overhead); else largest 8-aligned divisor <= 256."""
    if H <= 256:
        return H
    for th in (256, 128, 64, 32, 16, 8):
        if H % th == 0:
            return th
    return H


@functools.partial(jax.jit, static_argnames=("matmul_dtype",))
def split_module_forward(x_nchw, wm, bm, wa, ba, gamma, beta,
                         matmul_dtype=jnp.float32):
    # Layout: NCHW -> NHWC, then flatten (W, C) onto the 128-lane axis.
    x = jnp.transpose(x_nchw, (0, 2, 3, 1)).astype(jnp.float32)   # (N, H, W, C)
    N, H, W, C = x.shape
    share = wa.shape[0]
    assert C % share == 0, "SplitModule.forward requires channel % split_num == 0"
    assert wm.shape == (3, 3, C, C)
    split = C // share
    WC = W * C
    assert WC % 128 == 0, "lane-flattened layout needs W*C to be a multiple of 128"

    TH = _pick_row_tile(H)
    assert H % TH == 0
    HT = H // TH

    xf = x.reshape(N, H, WC)                                      # no spatial pad

    # ---- wrapper-side weight prep (tiny, done once under jit) ---------------
    # Banded Match weights: B[ky, wi*C+ci, wo*C+co] = wm[ky, wi-wo+1, ci, co]
    # for |wi-wo| <= 1, else 0 -> dx shifts AND width halo live in the weight.
    kx = jnp.arange(3)[:, None, None]
    wi = jnp.arange(W)[None, :, None]
    wo = jnp.arange(W)[None, None, :]
    band = (wi - wo + 1 == kx).astype(jnp.float32)                # (3, W, W)
    bmat = jnp.einsum("xuv,yxio->yuivo", band, wm.astype(jnp.float32))
    bmat = bmat.reshape(3, WC, WC).astype(matmul_dtype)
    bm_t = jnp.tile(bm.astype(jnp.float32), W).reshape(1, WC)

    a_blk = jnp.kron(jnp.eye(split, dtype=jnp.float32), wa.astype(jnp.float32))
    waff = jnp.kron(jnp.eye(W, dtype=jnp.float32), a_blk).astype(matmul_dtype)
    ba_t = jnp.tile(jnp.tile(ba.astype(jnp.float32), split), W).reshape(1, WC)

    # ---- VMEM budget derived from actual buffer sizes (double-buffered) -----
    isz = jnp.dtype(matmul_dtype).itemsize
    vmem_est = (2 * H * WC * 4            # image block per n
                + 2 * 3 * WC * WC * isz   # banded Match weights
                + 2 * WC * WC * isz       # block-diag 1x1 weights
                + 4 * 8 * WC * 4          # biases (sublane-padded)
                + 2 * TH * WC * 4         # z tile
                + 2 * 8 * WC * 4          # stats tile (sublane-padded)
                + (TH + 8) * WC * 4)      # scratch
    vmem_limit = int(min(64 << 20, max(4 * vmem_est, 16 << 20)))  # 64 MiB cap (v7x)

    flops = 2 * N * H * WC * (3 * WC + WC)
    bytes_acc = (xf.size * 4 + bmat.size * isz + waff.size * isz
                 + (bm_t.size + ba_t.size) * 4
                 + N * H * WC * 4 + N * HT * 2 * WC * 4)

    z, stats = pl.pallas_call(
        _match_affine_kernel,
        out_shape=(jax.ShapeDtypeStruct((N, H, WC), jnp.float32),
                   jax.ShapeDtypeStruct((N, HT, 2, WC), jnp.float32)),
        grid=(N, HT),
        in_specs=[
            # whole image per n: block index constant over h -> DMA'd once, reused
            pl.BlockSpec((1, H, WC), lambda n, h: (n, 0, 0)),
            pl.BlockSpec((3, WC, WC), lambda n, h: (0, 0, 0)),
            pl.BlockSpec((1, WC), lambda n, h: (0, 0)),
            pl.BlockSpec((WC, WC), lambda n, h: (0, 0)),
            pl.BlockSpec((1, WC), lambda n, h: (0, 0)),
        ],
        out_specs=(
            pl.BlockSpec((1, TH, WC), lambda n, h: (n, h, 0)),
            pl.BlockSpec((1, 1, 2, WC), lambda n, h: (n, h, 0, 0)),
        ),
        scratch_shapes=[pltpu.VMEM((TH + 2, WC), jnp.float32)],
        compiler_params=pltpu.CompilerParams(
            dimension_semantics=("parallel", "parallel"),
            vmem_limit_bytes=vmem_limit),
        cost_estimate=pl.CostEstimate(flops=flops, transcendentals=0,
                                      bytes_accessed=bytes_acc),
    )(xf, bmat, bm_t, waff, ba_t)

    # ---- BatchNorm finalize: exact training-mode batch stats over (N, H, W) --
    # NOTE: E[x^2]-E[x]^2 in f32 is fine at these scales; switch to a shifted /
    # two-pass variance for very large N*H*W or large activation means.
    s = jnp.sum(stats, axis=(0, 1)).reshape(2, W, C).sum(axis=1)  # (2, C)
    count = N * H * W
    mean = s[0] / count
    var = jnp.maximum(s[1] / count - mean * mean, 0.0)            # biased variance
    gamma_full = jnp.tile(gamma.astype(jnp.float32), split)
    beta_full = jnp.tile(beta.astype(jnp.float32), split)
    scale_c = gamma_full * jax.lax.rsqrt(var + BN_EPS)
    shift_c = beta_full - mean * scale_c
    scale = jnp.tile(scale_c, W)
    shift = jnp.tile(shift_c, W)

    # BN scale/shift + ReLU is pure mem-bound: leave it to XLA so it fuses with
    # the NHWC->NCHW transpose into ONE HBM round trip (no second pallas pass).
    out = jnp.maximum(z * scale[None, None, :] + shift[None, None, :], 0.0)
    out = out.reshape(N, H, W, C)
    return jnp.transpose(out, (0, 3, 1, 2))                        # back to NCHW


def init_params(key, channel, split_num):
    share = channel // split_num
    mod = channel % split_num
    assert mod == 0, "SplitModule.forward only works when channel % split_num == 0"
    k1, k2, k3, k4, k5, k6 = jax.random.split(key, 6)
    wm = 0.1 * jax.random.normal(k1, (3, 3, channel, channel - mod), jnp.float32)  # HWIO
    bm = 0.1 * jax.random.normal(k2, (channel - mod,), jnp.float32)
    wa = 0.1 * jax.random.normal(k3, (share, share), jnp.float32)  # (Cin, Cout)
    ba = 0.1 * jax.random.normal(k4, (share,), jnp.float32)
    gamma = 1.0 + 0.05 * jax.random.normal(k5, (share,), jnp.float32)
    beta = 0.05 * jax.random.normal(k6, (share,), jnp.float32)
    return dict(wm=wm, bm=bm, wa=wa, ba=ba, gamma=gamma, beta=beta)


def reference_forward(x_nchw, wm, bm, wa, ba, gamma, beta, split_num):
    """Pure-JAX reference (XLA conv) for correctness checking."""
    x = jnp.transpose(x_nchw, (0, 2, 3, 1)).astype(jnp.float32)
    y = jax.lax.conv_general_dilated(
        x, wm, window_strides=(1, 1), padding=((1, 1), (1, 1)),
        dimension_numbers=("NHWC", "HWIO", "NHWC"),
        precision=jax.lax.Precision.HIGHEST) + bm
    C = y.shape[-1]
    share = C // split_num
    parts = []
    for j in range(split_num):
        zj = y[..., j * share:(j + 1) * share]
        z = jnp.einsum("nhwc,cd->nhwd", zj, wa,
                       precision=jax.lax.Precision.HIGHEST) + ba
        mean = jnp.mean(z, axis=(0, 1, 2), keepdims=True)
        var = jnp.mean((z - mean) ** 2, axis=(0, 1, 2), keepdims=True)
        zn = (z - mean) / jnp.sqrt(var + BN_EPS)
        parts.append(jnp.maximum(zn * gamma + beta, 0.0))
    out = jnp.concatenate(parts, axis=-1)
    return jnp.transpose(out, (0, 3, 1, 2))


if __name__ == "__main__":
    channel, split_num = 8, 2
    N, H, W = 2, 16, 16

    key = jax.random.PRNGKey(0)
    kx_in, kp = jax.random.split(key)
    x = jax.random.normal(kx_in, (N, channel, H, W), jnp.float32)  # NCHW like PyTorch
    p = init_params(kp, channel, split_num)
    args = (x, p["wm"], p["bm"], p["wa"], p["ba"], p["gamma"], p["beta"])

    out = jax.block_until_ready(split_module_forward(*args))
    assert out.shape == (N, channel, H, W)

    ref = reference_forward(*args, split_num=split_num)
    max_err = float(jnp.max(jnp.abs(out - ref)))
    if not bool(jnp.allclose(out, ref, rtol=1e-3, atol=1e-3)):
        raise AssertionError(f"f32 Pallas kernel mismatch vs reference, max |err|={max_err}")

    # bf16 MXU path (both matmuls in bf16, f32 accumulate); loose smoke tolerance.
    out_bf16 = jax.block_until_ready(
        split_module_forward(*args, matmul_dtype=jnp.bfloat16))
    max_err_bf16 = float(jnp.max(jnp.abs(out_bf16 - ref)))
    if not max_err_bf16 < 0.35:
        raise AssertionError(f"bf16 Pallas kernel too far off, max |err|={max_err_bf16}")

    print("KERNEL_OK")
</pallas_src>

<mosaic_0001>
module attributes {stable_mosaic.version = 11 : i64} {
  func.func @_match_affine_kernel(%arg0: i32, %arg1: i32, %arg2: memref<1x16x128xf32, #tpu.memory_space<vmem>>, %arg3: memref<3x128x128xf32, #tpu.memory_space<vmem>>, %arg4: memref<1x128xf32, #tpu.memory_space<vmem>>, %arg5: memref<128x128xf32, #tpu.memory_space<vmem>>, %arg6: memref<1x128xf32, #tpu.memory_space<vmem>>, %arg7: memref<1x16x128xf32, #tpu.memory_space<vmem>>, %arg8: memref<1x1x2x128xf32, #tpu.memory_space<vmem>>, %arg9: memref<18x128xf32, #tpu.memory_space<vmem>>) attributes {dimension_semantics = [#tpu.dimension_semantics<parallel>, #tpu.dimension_semantics<parallel>], iteration_bounds = array<i64: 2, 1>, scalar_prefetch = 0 : i64, scratch_operands = 1 : i64, tpu.core_type = #tpu.core_type<tc>, window_params = [{transform_indices = @transform_0, window_bounds = array<i64: 1, 16, 128>}, {pipeline_mode = #tpu.pipeline_mode<synchronous>, transform_indices = @transform_1, window_bounds = array<i64: 3, 128, 128>}, {pipeline_mode = #tpu.pipeline_mode<synchronous>, transform_indices = @transform_2, window_bounds = array<i64: 1, 128>}, {pipeline_mode = #tpu.pipeline_mode<synchronous>, transform_indices = @transform_3, window_bounds = array<i64: 128, 128>}, {pipeline_mode = #tpu.pipeline_mode<synchronous>, transform_indices = @transform_4, window_bounds = array<i64: 1, 128>}, {transform_indices = @transform_5, window_bounds = array<i64: 1, 16, 128>}, {transform_indices = @transform_6, window_bounds = array<i64: 1, 1, 2, 128>}]} {
    %c16_i32 = arith.constant 16 : i32
    %0 = arith.muli %arg1, %c16_i32 : i32
    %1 = tpu.assume_multiple %0, 16 : i32
    %c0 = arith.constant 0 : index
    %2 = arith.index_cast %1 : i32 to index
    %c0_0 = arith.constant 0 : index
    %3 = vector.load %arg2[%c0, %2, %c0_0] : memref<1x16x128xf32, #tpu.memory_space<vmem>>, vector<1x16x128xf32>
    %4 = vector.shape_cast %3 : vector<1x16x128xf32> to vector<16x128xf32>
    %c1 = arith.constant 1 : index
    %c0_1 = arith.constant 0 : index
    %5 = vector.load %arg9[%c1, %c0_1] : memref<18x128xf32, #tpu.memory_space<vmem>>, vector<16x128xf32>
    tpu.vector_store %arg9[%c1, %c0_1], %4 {strides = array<i32>} : memref<18x128xf32, #tpu.memory_space<vmem>>, vector<16x128xf32>,
    %c0_i32 = arith.constant 0 : i32
    %6 = arith.cmpi eq, %arg1, %c0_i32 : i32
    %7 = arith.extui %6 : i1 to i32
    %c0_i32_2 = arith.constant 0 : i32
    %8 = arith.cmpi ne, %7, %c0_i32_2 : i32
    scf.if %8 {
      %cst_45 = arith.constant 0.000000e+00 : f32
      %54 = vector.broadcast %cst_45 : f32 to vector<1x128xf32>
      %c0_46 = arith.constant 0 : index
      %c0_47 = arith.constant 0 : index
      %55 = vector.load %arg9[%c0_46, %c0_47] : memref<18x128xf32, #tpu.memory_space<vmem>>, vector<1x128xf32>
      tpu.vector_store %arg9[%c0_46, %c0_47], %54 {strides = array<i32>} : memref<18x128xf32, #tpu.memory_space<vmem>>, vector<1x128xf32>,
    } else {
    }
    %c0_i32_3 = arith.constant 0 : i32
    %9 = arith.cmpi sgt, %arg1, %c0_i32_3 : i32
    %10 = arith.extui %9 : i1 to i32
    %c0_i32_4 = arith.constant 0 : i32
    %11 = arith.cmpi ne, %10, %c0_i32_4 : i32
    scf.if %11 {
      %c1_i32 = arith.constant 1 : i32
      %54 = arith.subi %1, %c1_i32 : i32
      %c0_45 = arith.constant 0 : index
      %55 = arith.index_cast %54 : i32 to index
      %c0_46 = arith.constant 0 : index
      %56 = vector.load %arg2[%c0_45, %55, %c0_46] : memref<1x16x128xf32, #tpu.memory_space<vmem>>, vector<1x1x128xf32>
      %57 = vector.shape_cast %56 : vector<1x1x128xf32> to vector<1x128xf32>
      %c0_47 = arith.constant 0 : index
      %c0_48 = arith.constant 0 : index
      %58 = vector.load %arg9[%c0_47, %c0_48] : memref<18x128xf32, #tpu.memory_space<vmem>>, vector<1x128xf32>
      tpu.vector_store %arg9[%c0_47, %c0_48], %57 {strides = array<i32>} : memref<18x128xf32, #tpu.memory_space<vmem>>, vector<1x128xf32>,
    } else {
    }
    %c0_i32_5 = arith.constant 0 : i32
    %12 = arith.cmpi eq, %arg1, %c0_i32_5 : i32
    %13 = arith.extui %12 : i1 to i32
    %c0_i32_6 = arith.constant 0 : i32
    %14 = arith.cmpi ne, %13, %c0_i32_6 : i32
    scf.if %14 {
      %cst_45 = arith.constant 0.000000e+00 : f32
      %54 = vector.broadcast %cst_45 : f32 to vector<1x128xf32>
      %c17 = arith.constant 17 : index
      %c0_46 = arith.constant 0 : index
      %55 = vector.load %arg9[%c17, %c0_46] : memref<18x128xf32, #tpu.memory_space<vmem>>, vector<1x128xf32>
      tpu.vector_store %arg9[%c17, %c0_46], %54 {strides = array<i32>} : memref<18x128xf32, #tpu.memory_space<vmem>>, vector<1x128xf32>,
    } else {
    }
    %c0_i32_7 = arith.constant 0 : i32
    %15 = arith.cmpi slt, %arg1, %c0_i32_7 : i32
    %16 = arith.extui %15 : i1 to i32
    %c0_i32_8 = arith.constant 0 : i32
    %17 = arith.cmpi ne, %16, %c0_i32_8 : i32
    scf.if %17 {
      %c16_i32_45 = arith.constant 16 : i32
      %54 = arith.addi %1, %c16_i32_45 : i32
      %c0_46 = arith.constant 0 : index
      %55 = arith.index_cast %54 : i32 to index
      %c0_47 = arith.constant 0 : index
      %56 = vector.load %arg2[%c0_46, %55, %c0_47] : memref<1x16x128xf32, #tpu.memory_space<vmem>>, vector<1x1x128xf32>
      %57 = vector.shape_cast %56 : vector<1x1x128xf32> to vector<1x128xf32>
      %c17 = arith.constant 17 : index
      %c0_48 = arith.constant 0 : index
      %58 = vector.load %arg9[%c17, %c0_48] : memref<18x128xf32, #tpu.memory_space<vmem>>, vector<1x128xf32>
      tpu.vector_store %arg9[%c17, %c0_48], %57 {strides = array<i32>} : memref<18x128xf32, #tpu.memory_space<vmem>>, vector<1x128xf32>,
    } else {
    }
    %c0_9 = arith.constant 0 : index
    %c0_10 = arith.constant 0 : index
    %18 = vector.load %arg9[%c0_9, %c0_10] : memref<18x128xf32, #tpu.memory_space<vmem>>, vector<16x128xf32>
    %c0_11 = arith.constant 0 : index
    %c0_12 = arith.constant 0 : index
    %c0_13 = arith.constant 0 : index
    %19 = vector.load %arg3[%c0_11, %c0_12, %c0_13] : memref<3x128x128xf32, #tpu.memory_space<vmem>>, vector<1x128x128xf32>
    %20 = vector.shape_cast %19 : vector<1x128x128xf32> to vector<128x128xf32>
    %cst = arith.constant dense<0.000000e+00> : vector<16x128xf32>
    %21 = tpu.matmul %18, %20, %cst {dimension_numbers = #tpu.dot_dimension_numbers<[1], [0], [0], [1], [0, 0, 1, 1], [], []>} : vector<16x128xf32>, vector<128x128xf32>, vector<16x128xf32> -> vector<16x128xf32>
    %c1_14 = arith.constant 1 : index
    %c0_15 = arith.constant 0 : index
    %22 = vector.load %arg9[%c1_14, %c0_15] : memref<18x128xf32, #tpu.memory_space<vmem>>, vector<16x128xf32>
    %c1_16 = arith.constant 1 : index
    %c0_17 = arith.constant 0 : index
    %c0_18 = arith.constant 0 : index
    %23 = vector.load %arg3[%c1_16, %c0_17, %c0_18] : memref<3x128x128xf32, #tpu.memory_space<vmem>>, vector<1x128x128xf32>
    %24 = vector.shape_cast %23 : vector<1x128x128xf32> to vector<128x128xf32>
    %cst_19 = arith.constant dense<0.000000e+00> : vector<16x128xf32>
    %25 = tpu.matmul %22, %24, %cst_19 {dimension_numbers = #tpu.dot_dimension_numbers<[1], [0], [0], [1], [0, 0, 1, 1], [], []>} : vector<16x128xf32>, vector<128x128xf32>, vector<16x128xf32> -> vector<16x128xf32>
    %26 = arith.addf %21, %25 : vector<16x128xf32>
    %c2 = arith.constant 2 : index
    %c0_20 = arith.constant 0 : index
    %27 = vector.load %arg9[%c2, %c0_20] : memref<18x128xf32, #tpu.memory_space<vmem>>, vector<16x128xf32>
    %c2_21 = arith.constant 2 : index
    %c0_22 = arith.constant 0 : index
    %c0_23 = arith.constant 0 : index
    %28 = vector.load %arg3[%c2_21, %c0_22, %c0_23] : memref<3x128x128xf32, #tpu.memory_space<vmem>>, vector<1x128x128xf32>
    %29 = vector.shape_cast %28 : vector<1x128x128xf32> to vector<128x128xf32>
    %cst_24 = arith.constant dense<0.000000e+00> : vector<16x128xf32>
    %30 = tpu.matmul %27, %29, %cst_24 {dimension_numbers = #tpu.dot_dimension_numbers<[1], [0], [0], [1], [0, 0, 1, 1], [], []>} : vector<16x128xf32>, vector<128x128xf32>, vector<16x128xf32> -> vector<16x128xf32>
    %31 = arith.addf %26, %30 : vector<16x128xf32>
    %c0_25 = arith.constant 0 : index
    %c0_26 = arith.constant 0 : index
    %32 = vector.load %arg4[%c0_25, %c0_26] : memref<1x128xf32, #tpu.memory_space<vmem>>, vector<1x128xf32>
    %33 = vector.broadcast %32 : vector<1x128xf32> to vector<16x128xf32>
    %34 = arith.addf %31, %33 : vector<16x128xf32>
    %c0_27 = arith.constant 0 : index
    %c0_28 = arith.constant 0 : index
    %35 = vector.load %arg5[%c0_27, %c0_28] : memref<128x128xf32, #tpu.memory_space<vmem>>, vector<128x128xf32>
    %cst_29 = arith.constant dense<0.000000e+00> : vector<16x128xf32>
    %36 = tpu.matmul %34, %35, %cst_29 {dimension_numbers = #tpu.dot_dimension_numbers<[1], [0], [0], [1], [0, 0, 1, 1], [], []>} : vector<16x128xf32>, vector<128x128xf32>, vector<16x128xf32> -> vector<16x128xf32>
    %c0_30 = arith.constant 0 : index
    %c0_31 = arith.constant 0 : index
    %37 = vector.load %arg6[%c0_30, %c0_31] : memref<1x128xf32, #tpu.memory_space<vmem>>, vector<1x128xf32>
    %38 = vector.broadcast %37 : vector<1x128xf32> to vector<16x128xf32>
    %39 = arith.addf %36, %38 : vector<16x128xf32>
    %c0_32 = arith.constant 0 : index
    %c0_33 = arith.constant 0 : index
    %c0_34 = arith.constant 0 : index
    %40 = vector.load %arg7[%c0_32, %c0_33, %c0_34] : memref<1x16x128xf32, #tpu.memory_space<vmem>>, vector<1x16x128xf32>
    %41 = vector.shape_cast %40 : vector<1x16x128xf32> to vector<16x128xf32>
    %42 = vector.shape_cast %39 : vector<16x128xf32> to vector<1x16x128xf32>
    tpu.vector_store %arg7[%c0_32, %c0_33, %c0_34], %42 {strides = array<i32>} : memref<1x16x128xf32, #tpu.memory_space<vmem>>, vector<1x16x128xf32>,
    %cst_35 = arith.constant dense<0.000000e+00> : vector<128xf32>
    %43 = vector.multi_reduction <add>, %39, %cst_35 [0] : vector<16x128xf32> to vector<128xf32>
    %44 = vector.shape_cast %43 : vector<128xf32> to vector<1x128xf32>
    %c0_36 = arith.constant 0 : index
    %c0_37 = arith.constant 0 : index
    %c0_38 = arith.constant 0 : index
    %c0_39 = arith.constant 0 : index
    %45 = vector.load %arg8[%c0_36, %c0_37, %c0_38, %c0_39] : memref<1x1x2x128xf32, #tpu.memory_space<vmem>>, vector<1x1x1x128xf32>
    %46 = vector.shape_cast %45 : vector<1x1x1x128xf32> to vector<1x128xf32>
    %47 = vector.shape_cast %44 : vector<1x128xf32> to vector<1x1x1x128xf32>
    tpu.vector_store %arg8[%c0_36, %c0_37, %c0_38, %c0_39], %47 {strides = array<i32>} : memref<1x1x2x128xf32, #tpu.memory_space<vmem>>, vector<1x1x1x128xf32>,
    %48 = arith.mulf %39, %39 : vector<16x128xf32>
    %cst_40 = arith.constant dense<0.000000e+00> : vector<128xf32>
    %49 = vector.multi_reduction <add>, %48, %cst_40 [0] : vector<16x128xf32> to vector<128xf32>
    %50 = vector.shape_cast %49 : vector<128xf32> to vector<1x128xf32>
    %c0_41 = arith.constant 0 : index
    %c0_42 = arith.constant 0 : index
    %c1_43 = arith.constant 1 : index
    %c0_44 = arith.constant 0 : index
    %51 = vector.load %arg8[%c0_41, %c0_42, %c1_43, %c0_44] : memref<1x1x2x128xf32, #tpu.memory_space<vmem>>, vector<1x1x1x128xf32>
    %52 = vector.shape_cast %51 : vector<1x1x1x128xf32> to vector<1x128xf32>
    %53 = vector.shape_cast %50 : vector<1x128xf32> to vector<1x1x1x128xf32>
    tpu.vector_store %arg8[%c0_41, %c0_42, %c1_43, %c0_44], %53 {strides = array<i32>} : memref<1x1x2x128xf32, #tpu.memory_space<vmem>>, vector<1x1x1x128xf32>,
    return
  }
  func.func @transform_0(%arg0: i32, %arg1: i32) -> (i32, i32, i32) {
    %c0_i32 = arith.constant 0 : i32
    %c0_i32_0 = arith.constant 0 : i32
    %c0_i32_1 = arith.constant 0 : i32
    return %arg0, %c0_i32, %c0_i32_0 : i32, i32, i32
  }
  func.func @transform_1(%arg0: i32, %arg1: i32) -> (i32, i32, i32) {
    %c0_i32 = arith.constant 0 : i32
    %c0_i32_0 = arith.constant 0 : i32
    %c0_i32_1 = arith.constant 0 : i32
    %c0_i32_2 = arith.constant 0 : i32
    return %c0_i32, %c0_i32_0, %c0_i32_1 : i32, i32, i32
  }
  func.func @transform_2(%arg0: i32, %arg1: i32) -> (i32, i32) {
    %c0_i32 = arith.constant 0 : i32
    %c0_i32_0 = arith.constant 0 : i32
    %c0_i32_1 = arith.constant 0 : i32
    return %c0_i32, %c0_i32_0 : i32, i32
  }
  func.func @transform_3(%arg0: i32, %arg1: i32) -> (i32, i32) {
    %c0_i32 = arith.constant 0 : i32
    %c0_i32_0 = arith.constant 0 : i32
    %c0_i32_1 = arith.constant 0 : i32
    return %c0_i32, %c0_i32_0 : i32, i32
  }
  func.func @transform_4(%arg0: i32, %arg1: i32) -> (i32, i32) {
    %c0_i32 = arith.constant 0 : i32
    %c0_i32_0 = arith.constant 0 : i32
    %c0_i32_1 = arith.constant 0 : i32
    return %c0_i32, %c0_i32_0 : i32, i32
  }
  func.func @transform_5(%arg0: i32, %arg1: i32) -> (i32, i32, i32) {
    %c0_i32 = arith.constant 0 : i32
    %c0_i32_0 = arith.constant 0 : i32
    return %arg0, %arg1, %c0_i32 : i32, i32, i32
  }
  func.func @transform_6(%arg0: i32, %arg1: i32) -> (i32, i32, i32, i32) {
    %c0_i32 = arith.constant 0 : i32
    %c0_i32_0 = arith.constant 0 : i32
    %c0_i32_1 = arith.constant 0 : i32
    return %arg0, %arg1, %c0_i32, %c0_i32_0 : i32, i32, i32, i32
  }
}

</mosaic_0001>

<llo_original>
// kernel: tile.42
$region0: #{tile.42}
  #allocation0 [shape = 's32[1]{0}', space=sflag, size = 0x4, scoped, tag = 'scoped memory for tile.42']
  %s0 = inlined_call_operand.vmem [shape: f32[4], index: 0, kind: input, shape index: {}]
  %s1 = inlined_call_operand.vmem [shape: f32[2,4], index: 1, kind: output, shape index: {}]
  // Predicated region
  $region2: #{tile.42} parent=0 // pred_check
    _
  $region3: #{tile.42} parent=0 // pred_check_branch
    %3 = sbr.rel (0) target = $region5
  $region4: #{tile.42} parent=0 // pred_region
    _
  $region5: #{tile.42} parent=0 // pred_fallthru
    _
  %v4 = vld [vmem:[%s0] ss:$0 sm:$0xff]
  %5 = vst [vmem:[%s1] sm:$0x3] %v4

// kernel: tile.45
$region0: #{tile.45}
  %s0 = inlined_call_operand.vmem [shape: f32[2,4], index: 0, kind: input, shape index: {}]
  %s1 = inlined_call_operand.vmem [shape: f32[8], index: 1, kind: output, shape index: {}]
  $region1: #{tile.45} parent=0
    #allocation0 [shape = 'u8[4096]{0}', space=vmem, size = 0x1000, scoped, tag = 'scoped mem for output reshape']
    #allocation1 [shape = 'u8[4096]{0}', space=vmem, size = 0x1000, scoped, tag = 'scoped mem for input reshape']
    %s3 = sshll.u32 1, 2
    %s4 = ssub.s32 %s3, 1
    %v5 = vld [vmem:[%s0] sm:%s4]
    %6 = vst [vmem:[#allocation1] sm:%s4] %v5
    %v7 = vld [vmem:[#allocation1] sm:$0x1]
    %vm8 = vcmask 31744
    %9 = vst.msk [vmem:[#allocation0] sm:$0x1] %vm8, %v7
    %s10 = scalar_lea.vmem [#allocation1], 1
    %v11 = vld [vmem:[%s10] sm:$0x1]
    %12 = vrot.lane.b32.xlu0 %v11, 4
    %v13 = vpop.permute.xlu0 %12
    %vm14 = vcmask 64544
    %15 = vst.msk [vmem:[#allocation0] sm:$0x1] %vm14, %v13
    %s17 = sshll.u32 1, 1
    %s18 = ssub.s32 %s17, 1
    %v20 = vld [vmem:[#allocation0] sm:%s18]
    %s21 = sshll.u32 1, 1
    %s22 = ssub.s32 %s21, 1
    %23 = vst [vmem:[%s1] sm:%s22] %v20

// kernel: tile.46
$region0: #{tile.46}
  #allocation0 [shape = 's32[1]{0}', space=sflag, size = 0x4, scoped, tag = 'scoped memory for tile.46']
  %s0 = inlined_call_operand.vmem [shape: f32[8], index: 0, kind: input, shape index: {}]
  %s1 = inlined_call_operand.vmem [shape: f32[16,8], index: 1, kind: output, shape index: {}]
  // Predicated region
  $region2: #{tile.46} parent=0 // pred_check
    _
  $region3: #{tile.46} parent=0 // pred_check_branch
    %3 = sbr.rel (0) target = $region5
  $region4: #{tile.46} parent=0 // pred_region
    _
  $region5: #{tile.46} parent=0 // pred_fallthru
    _
  %v4 = vld [vmem:[%s0] ss:$0 sm:$0xff]
  %5 = vst [vmem:[%s1] sm:$0xff] %v4
  %s6 = scalar_lea.vmem %s1, 8
  %7 = vst [vmem:[%s6] sm:$0xff] %v4

// kernel: tile.47
$region0: #{tile.47}
  %s0 = inlined_call_operand.vmem [shape: f32[16,8], index: 0, kind: input, shape index: {}]
  %s1 = inlined_call_operand.vmem [shape: f32[1,128], index: 1, kind: output, shape index: {}]
  $region1: #{tile.47} parent=0
    #allocation0 [shape = 'u8[4096]{0}', space=vmem, size = 0x1000, scoped, tag = 'scoped mem for output reshape']
    %v2 = vld [vmem:[%s0] sm:$0x1]
    %vm3 = vcmask 64512
    %4 = vst.msk [vmem:[#allocation0] sm:$0x1] %vm3, %v2
    %s5 = scalar_lea.vmem %s0, 15
    %v6 = vld [vmem:[%s5] sm:$0x1]
    %7 = vrot.lane.b32.xlu0 %v6, 120
    %v8 = vpop.permute.xlu0 %7
    %vm9 = vcmask 1048512
    %10 = vst.msk [vmem:[#allocation0] sm:$0x1] %vm9, %v8
    %s11 = scalar_lea.vmem %s0, 14
    %v12 = vld [vmem:[%s11] sm:$0x1]
    %13 = vrot.lane.b32.xlu0 %v12, 112
    %v14 = vpop.permute.xlu0 %13
    %vm15 = vcmask 982912
    %16 = vst.msk [vmem:[#allocation0] sm:$0x1] %vm15, %v14
    %s17 = scalar_lea.vmem %s0, 13
    %v18 = vld [vmem:[%s17] sm:$0x1]
    %19 = vrot.lane.b32.xlu0 %v18, 104
    %v20 = vpop.permute.xlu0 %19
    %vm21 = vcmask 917312
    %22 = vst.msk [vmem:[#allocation0] sm:$0x1] %vm21, %v20
    %s23 = scalar_lea.vmem %s0, 12
    %v24 = vld [vmem:[%s23] sm:$0x1]
    %25 = vrot.lane.b32.xlu0 %v24, 96
    %v26 = vpop.permute.xlu0 %25
    %vm27 = vcmask 851712
    %28 = vst.msk [vmem:[#allocation0] sm:$0x1] %vm27, %v26
    %s29 = scalar_lea.vmem %s0, 11
    %v30 = vld [vmem:[%s29] sm:$0x1]
    %31 = vrot.lane.b32.xlu0 %v30, 88
    %v32 = vpop.permute.xlu0 %31
    %vm33 = vcmask 786112
    %34 = vst.msk [vmem:[#allocation0] sm:$0x1] %vm33, %v32
    %s35 = scalar_lea.vmem %s0, 10
    %v36 = vld [vmem:[%s35] sm:$0x1]
    %37 = vrot.lane.b32.xlu0 %v36, 80
    %v38 = vpop.permute.xlu0 %37
    %vm39 = vcmask 720512
    %40 = vst.msk [vmem:[#allocation0] sm:$0x1] %vm39, %v38
    %s41 = scalar_lea.vmem %s0, 9
    %v42 = vld [vmem:[%s41] sm:$0x1]
    %43 = vrot.lane.b32.xlu0 %v42, 72
    %v44 = vpop.permute.xlu0 %43
    %vm45 = vcmask 654912
    %46 = vst.msk [vmem:[#allocation0] sm:$0x1] %vm45, %v44
    %s47 = scalar_lea.vmem %s0, 8
    %v48 = vld [vmem:[%s47] sm:$0x1]
    %49 = vrot.lane.b32.xlu0 %v48, 64
    %v50 = vpop.permute.xlu0 %49
    %vm51 = vcmask 589312
    %52 = vst.msk [vmem:[#allocation0] sm:$0x1] %vm51, %v50
    %s53 = scalar_lea.vmem %s0, 7
    %v54 = vld [vmem:[%s53] sm:$0x1]
    %55 = vrot.lane.b32.xlu0 %v54, 56
    %v56 = vpop.permute.xlu0 %55
    %vm57 = vcmask 523712
    %58 = vst.msk [vmem:[#allocation0] sm:$0x1] %vm57, %v56
    %s59 = scalar_lea.vmem %s0, 6
    %v60 = vld [vmem:[%s59] sm:$0x1]
    %61 = vrot.lane.b32.xlu0 %v60, 48
    %v62 = vpop.permute.xlu0 %61
    %vm63 = vcmask 458112
    %64 = vst.msk [vmem:[#allocation0] sm:$0x1] %vm63, %v62
    %s65 = scalar_lea.vmem %s0, 5
    %v66 = vld [vmem:[%s65] sm:$0x1]
    %67 = vrot.lane.b32.xlu0 %v66, 40
    %v68 = vpop.permute.xlu0 %67
    %vm69 = vcmask 392512
    %70 = vst.msk [vmem:[#allocation0] sm:$0x1] %vm69, %v68
    %s71 = scalar_lea.vmem %s0, 4
    %v72 = vld [vmem:[%s71] sm:$0x1]
    %73 = vrot.lane.b32.xlu0 %v72, 32
    %v74 = vpop.permute.xlu0 %73
    %vm75 = vcmask 326912
    %76 = vst.msk [vmem:[#allocation0] sm:$0x1] %vm75, %v74
    %s77 = scalar_lea.vmem %s0, 3
    %v78 = vld [vmem:[%s77] sm:$0x1]
    %79 = vrot.lane.b32.xlu0 %v78, 24
    %v80 = vpop.permute.xlu0 %79
    %vm81 = vcmask 261312
    %82 = vst.msk [vmem:[#allocation0] sm:$0x1] %vm81, %v80
    %s83 = scalar_lea.vmem %s0, 2
    %v84 = vld [vmem:[%s83] sm:$0x1]
    %85 = vrot.lane.b32.xlu0 %v84, 16
    %v86 = vpop.permute.xlu0 %85
    %vm87 = vcmask 195712
    %88 = vst.msk [vmem:[#allocation0] sm:$0x1] %vm87, %v86
    %s89 = scalar_lea.vmem %s0, 1
    %v90 = vld [vmem:[%s89] sm:$0x1]
    %91 = vrot.lane.b32.xlu0 %v90, 8
    %v92 = vpop.permute.xlu0 %91
    %vm93 = vcmask 130112
    %94 = vst.msk [vmem:[#allocation0] sm:$0x1] %vm93, %v92
    %s96 = sshll.u32 1, 1
    %s97 = ssub.s32 %s96, 1
    %v99 = vld [vmem:[#allocation0] sm:%s97]
    %s100 = sshll.u32 1, 1
    %s101 = ssub.s32 %s100, 1
    %102 = vst [vmem:[%s1] sm:%s101] %v99

// kernel: split_module_forward.1
$region0: #{split_module_forward.1}
  #allocation0 [shape = 'u32[]', space=smem, size = 0x4, offset = 0x4, fixed_abs, tag = 'smem constant byte address 0x4 - core index']
  #allocation1 [shape = 'u32[144,128]{1,0:T(1,128)}', space=vmem, size = 0x12000, scoped, tag = 'internal scratch']
  #allocation2 [shape = 'f32[18,128]{1,0:T(8,128)}', space=vmem, size = 0x3000, scoped, tag = 'scratch operand']
  %s0 = inlined_call_operand.vmem [shape: f32[2,16,128], index: 0, kind: input, shape index: {}]
  %s1 = inlined_call_operand.vmem [shape: f32[3,128,128], index: 1, kind: input, shape index: {}]
  %s2 = inlined_call_operand.vmem [shape: f32[1,128], index: 2, kind: input, shape index: {}]
  %s3 = inlined_call_operand.vmem [shape: f32[128,128], index: 3, kind: input, shape index: {}]
  %s4 = inlined_call_operand.vmem [shape: f32[1,128], index: 4, kind: input, shape index: {}]
  %s5 = inlined_call_operand.vmem [shape: f32[2,16,128], index: 5, kind: output, shape index: {0}]
  %s6 = inlined_call_operand.vmem [shape: f32[2,1,2,128], index: 6, kind: output, shape index: {1}]
  %7 = xla_tuple %s5, %s6
  %s8 = sld [smem:[#allocation0]]
  $region77: #{split_module_forward.1} parent=0
    _
  %s10 = ssub.s32 1, %s8
  %s11 = scalar_select 0, %s10, %s8
  loop: start=0, step=1, limit=4
  $region2: #{split_module_forward.1} parent=0 // loop_pre_header
    _
  $region3: #{split_module_forward.1} parent=0 // loop_header
    %s13 = sphi 0, %s17
    %p14 = scmp.ge.s32.totalorder %s13, 4
    %s20 = sphi 0, %s32
    %s21 = sphi 0, %s28
    %s22 = sphi 0, %s20
    %s23 = sphi 0, %s21
    %s24 = sphi 0, %s22
    %s25 = sphi 0, %s23
    %s35 = sphi 0, %s37
    %s38 = sphi 0, %s35
    %s39 = sphi 0, %s38
    %s55 = sphi 0, %s39
    %s59 = sphi 0, %s59
    %s61 = sphi 0, %s59
    %s62 = sphi 0, %s61
    %s76 = sphi 0, %s62
    %s80 = sphi 0, %s80
    %s82 = sphi 0, %s80
    %s83 = sphi 0, %s82
    %s97 = sphi 0, %s83
    %s101 = sphi 0, %s101
    %s103 = sphi 0, %s101
    %s104 = sphi 0, %s103
    %s118 = sphi 0, %s104
    %s122 = sphi 0, %s122
    %s124 = sphi 0, %s122
    %s125 = sphi 0, %s124
    %s139 = sphi 0, %s125
    %s147 = sphi 0, %s149
    %s150 = sphi 0, %s147
    %s151 = sphi 0, %s150
    %s167 = sphi 0, %s151
    %s175 = sphi 0, %s177
    %s178 = sphi 0, %s175
    %s179 = sphi 0, %s178
    %s195 = sphi 0, %s179
  $region4: #{split_module_forward.1} parent=0 // loop_header_branch
    %16 = sbr.rel (%p14) target = $region8
  $region5: #{split_module_forward.1} parent=0 // loop_body
    %s18 = ssub.s32 %s13, 1
    %s19 = ssub.s32 %s13, 2
    %s26 = sadd.s32 1, %s21
    %p27 = scmp.ge.s32.totalorder %s26, 1
    %s28 = scalar_select %p27, 0, %s26
    %s29 = sadd.s32 1, %s20
    %s30 = scalar_select %p27, %s29, %s20
    %p31 = scmp.ge.s32.totalorder %s30, 2
    %s32 = scalar_select %p31, 0, %s30
    %s33 = ssub.s32 %s20, %s32
    %p34 = scmp.eq.s32.totalorder %s33, 0
    %s36 = sadd.s32 %s35, 1
    %s37 = scalar_select %p34, %s35, %s36
    %p40 = pneg %p34
    %p41 = scmp.eq.s32.totalorder %s13, 1
    %p42 = por %p40, %p41
    %p43 = scmp.ne.s32.totalorder %s35, %s38
    %p44 = scmp.eq.s32.totalorder %s13, 0
    %p45 = por %p43, %p44
    %p46 = scmp.ne.s32.totalorder %s35, %s38
    %p47 = scmp.eq.s32.totalorder %s18, 1
    %p48 = por %p46, %p47
    %p49 = scmp.ne.s32.totalorder %s38, %s39
    %p50 = scmp.eq.s32.totalorder %s18, 0
    %p51 = por %p49, %p50
    %p52 = scmp.ne.s32.totalorder %s38, %s39
    %p53 = scmp.eq.s32.totalorder %s19, 1
    %p54 = por %p52, %p53
    %p56 = scmp.ne.s32.totalorder %s39, %s55
    %p57 = scmp.eq.s32.totalorder %s19, 0
    %p58 = por %p56, %p57
    %s60 = sadd.s32 %s59, 1
    %p63 = scmp.eq.s32.totalorder %s13, 1
    %p64 = scmp.ne.s32.totalorder %s59, %s61
    %p65 = scmp.eq.s32.totalorder %s13, 0
    %p66 = por %p64, %p65
    %p67 = scmp.ne.s32.totalorder %s59, %s61
    %p68 = scmp.eq.s32.totalorder %s18, 1
    %p69 = por %p67, %p68
    %p70 = scmp.ne.s32.totalorder %s61, %s62
    %p71 = scmp.eq.s32.totalorder %s18, 0
    %p72 = por %p70, %p71
    %p73 = scmp.ne.s32.totalorder %s61, %s62
    %p74 = scmp.eq.s32.totalorder %s19, 1
    %p75 = por %p73, %p74
    %p77 = scmp.ne.s32.totalorder %s62, %s76
    %p78 = scmp.eq.s32.totalorder %s19, 0
    %p79 = por %p77, %p78
    %s81 = sadd.s32 %s80, 1
    %p84 = scmp.eq.s32.totalorder %s13, 1
    %p85 = scmp.ne.s32.totalorder %s80, %s82
    %p86 = scmp.eq.s32.totalorder %s13, 0
    %p87 = por %p85, %p86
    %p88 = scmp.ne.s32.totalorder %s80, %s82
    %p89 = scmp.eq.s32.totalorder %s18, 1
    %p90 = por %p88, %p89
    %p91 = scmp.ne.s32.totalorder %s82, %s83
    %p92 = scmp.eq.s32.totalorder %s18, 0
    %p93 = por %p91, %p92
    %p94 = scmp.ne.s32.totalorder %s82, %s83
    %p95 = scmp.eq.s32.totalorder %s19, 1
    %p96 = por %p94, %p95
    %p98 = scmp.ne.s32.totalorder %s83, %s97
    %p99 = scmp.eq.s32.totalorder %s19, 0
    %p100 = por %p98, %p99
    %s102 = sadd.s32 %s101, 1
    %p105 = scmp.eq.s32.totalorder %s13, 1
    %p106 = scmp.ne.s32.totalorder %s101, %s103
    %p107 = scmp.eq.s32.totalorder %s13, 0
    %p108 = por %p106, %p107
    %p109 = scmp.ne.s32.totalorder %s101, %s103
    %p110 = scmp.eq.s32.totalorder %s18, 1
    %p111 = por %p109, %p110
    %p112 = scmp.ne.s32.totalorder %s103, %s104
    %p113 = scmp.eq.s32.totalorder %s18, 0
    %p114 = por %p112, %p113
    %p115 = scmp.ne.s32.totalorder %s103, %s104
    %p116 = scmp.eq.s32.totalorder %s19, 1
    %p117 = por %p115, %p116
    %p119 = scmp.ne.s32.totalorder %s104, %s118
    %p120 = scmp.eq.s32.totalorder %s19, 0
    %p121 = por %p119, %p120
    %s123 = sadd.s32 %s122, 1
    %p126 = scmp.eq.s32.totalorder %s13, 1
    %p127 = scmp.ne.s32.totalorder %s122, %s124
    %p128 = scmp.eq.s32.totalorder %s13, 0
    %p129 = por %p127, %p128
    %p130 = scmp.ne.s32.totalorder %s122, %s124
    %p131 = scmp.eq.s32.totalorder %s18, 1
    %p132 = por %p130, %p131
    %p133 = scmp.ne.s32.totalorder %s124, %s125
    %p134 = scmp.eq.s32.totalorder %s18, 0
    %p135 = por %p133, %p134
    %p136 = scmp.ne.s32.totalorder %s124, %s125
    %p137 = scmp.eq.s32.totalorder %s19, 1
    %p138 = por %p136, %p137
    %p140 = scmp.ne.s32.totalorder %s125, %s139
    %p141 = scmp.eq.s32.totalorder %s19, 0
    %p142 = por %p140, %p141
    %s143 = ssub.s32 %s20, %s32
    %s144 = ssub.s32 %s21, %s28
    %s145 = sor.u32 %s143, %s144
    %p146 = scmp.eq.s32.totalorder %s145, 0
    %s148 = sadd.s32 %s147, 1
    %s149 = scalar_select %p146, %s147, %s148
    %p152 = pneg %p146
    %p153 = scmp.eq.s32.totalorder %s13, 1
    %p154 = por %p152, %p153
    %p155 = scmp.ne.s32.totalorder %s147, %s150
    %p156 = scmp.eq.s32.totalorder %s13, 0
    %p157 = por %p155, %p156
    %p158 = scmp.ne.s32.totalorder %s147, %s150
    %p159 = scmp.eq.s32.totalorder %s18, 1
    %p160 = por %p158, %p159
    %p161 = scmp.ne.s32.totalorder %s150, %s151
    %p162 = scmp.eq.s32.totalorder %s18, 0
    %p163 = por %p161, %p162
    %p164 = scmp.ne.s32.totalorder %s150, %s151
    %p165 = scmp.eq.s32.totalorder %s19, 1
    %p166 = por %p164, %p165
    %p168 = scmp.ne.s32.totalorder %s151, %s167
    %p169 = scmp.eq.s32.totalorder %s19, 0
    %p170 = por %p168, %p169
    %s171 = ssub.s32 %s20, %s32
    %s172 = ssub.s32 %s21, %s28
    %s173 = sor.u32 %s171, %s172
    %p174 = scmp.eq.s32.totalorder %s173, 0
    %s176 = sadd.s32 %s175, 1
    %s177 = scalar_select %p174, %s175, %s176
    %p180 = pneg %p174
    %p181 = scmp.eq.s32.totalorder %s13, 1
    %p182 = por %p180, %p181
    %p183 = scmp.ne.s32.totalorder %s175, %s178
    %p184 = scmp.eq.s32.totalorder %s13, 0
    %p185 = por %p183, %p184
    %p186 = scmp.ne.s32.totalorder %s175, %s178
    %p187 = scmp.eq.s32.totalorder %s18, 1
    %p188 = por %p186, %p187
    %p189 = scmp.ne.s32.totalorder %s178, %s179
    %p190 = scmp.eq.s32.totalorder %s18, 0
    %p191 = por %p189, %p190
    %p192 = scmp.ne.s32.totalorder %s178, %s179
    %p193 = scmp.eq.s32.totalorder %s19, 1
    %p194 = por %p192, %p193
    %p196 = scmp.ne.s32.totalorder %s179, %s195
    %p197 = scmp.eq.s32.totalorder %s19, 0
    %p198 = por %p196, %p197
    %p199 = scmp.le.s32.totalorder 1, %s13
    %p200 = scmp.lt.s32.totalorder %s13, 3
    %p201 = pnand %p199, %p200
    %p202 = pneg %p201
    // Predicated region
    $region9: #{split_module_forward.1} parent=5 // pred_check
      _
    $region10: #{split_module_forward.1} parent=5 // pred_check_branch
      %204 = sbr.rel (%p201) target = $region12
    $region11: #{split_module_forward.1} parent=5 // pred_region
      %s205 = ssub.s32 %s13, 1
      // Predicated region
      $region13: #{split_module_forward.1} parent=11 // pred_check
        %p206 = pneg %p72
      $region14: #{split_module_forward.1} parent=11 // pred_check_branch
        %208 = sbr.rel (%p206) target = $region16
      $region15: #{split_module_forward.1} parent=11 // pred_region
        _
      $region16: #{split_module_forward.1} parent=11 // pred_fallthru
        _
      // Predicated region
      $region17: #{split_module_forward.1} parent=11 // pred_check
        %p209 = pneg %p93
      $region18: #{split_module_forward.1} parent=11 // pred_check_branch
        %211 = sbr.rel (%p209) target = $region20
      $region19: #{split_module_forward.1} parent=11 // pred_region
        _
      $region20: #{split_module_forward.1} parent=11 // pred_fallthru
        _
      // Predicated region
      $region21: #{split_module_forward.1} parent=11 // pred_check
        %p212 = pneg %p114
      $region22: #{split_module_forward.1} parent=11 // pred_check_branch
        %214 = sbr.rel (%p212) target = $region24
      $region23: #{split_module_forward.1} parent=11 // pred_region
        _
      $region24: #{split_module_forward.1} parent=11 // pred_fallthru
        _
      // Predicated region
      $region25: #{split_module_forward.1} parent=11 // pred_check
        %p215 = pneg %p135
      $region26: #{split_module_forward.1} parent=11 // pred_check_branch
        %217 = sbr.rel (%p215) target = $region28
      $region27: #{split_module_forward.1} parent=11 // pred_region
        _
      $region28: #{split_module_forward.1} parent=11 // pred_fallthru
        _
    $region12: #{split_module_forward.1} parent=5 // pred_fallthru
      _
    %p218 = scmp.lt.s32.totalorder %s13, 2
    // Predicated region
    $region29: #{split_module_forward.1} parent=5 // pred_check
      %p219 = pneg %p218
    $region30: #{split_module_forward.1} parent=5 // pred_check_branch
      %221 = sbr.rel (%p219) target = $region32
    $region31: #{split_module_forward.1} parent=5 // pred_region
      // Predicated region
      $region33: #{split_module_forward.1} parent=31 // pred_check
        %p222 = pneg %p45
      $region34: #{split_module_forward.1} parent=31 // pred_check_branch
        %224 = sbr.rel (%p222) target = $region36
      $region35: #{split_module_forward.1} parent=31 // pred_region
        %p225 = scmp.lt.s32.totalorder %s20, 1
        %s226 = scalar_select %p225, %s20, 1
        %s227 = smul.addr %s226, 2
        %s228 = smul.addr %s227, 8
        %s229 = scalar_lea.vmem %s0, %s228
      $region36: #{split_module_forward.1} parent=31 // pred_fallthru
        _
    $region32: #{split_module_forward.1} parent=5 // pred_fallthru
      _
    %p230 = scmp.le.s32.totalorder 1, %s13
    %p231 = scmp.lt.s32.totalorder %s13, 3
    %p232 = pnand %p230, %p231
    %p233 = pneg %p232
    // Predicated region
    $region37: #{split_module_forward.1} parent=5 // pred_check
      _
    $region38: #{split_module_forward.1} parent=5 // pred_check_branch
      %235 = sbr.rel (%p232) target = $region40
    $region39: #{split_module_forward.1} parent=5 // pred_region
      %s236 = ssub.s32 %s13, 1
      %p237 = scmp.lt.s32.totalorder %s22, 1
      %s238 = scalar_select %p237, %s22, 1
      %s239 = smul.addr %s238, 2
      %s240 = smul.addr %s239, 8
      %s241 = scalar_lea.vmem %s0, %s240
      %p242 = pneg %p51
      %p243 = pneg %p48
      %p244 = pneg %p72
      %p245 = pneg %p69
      %p246 = pneg %p93
      %p247 = pneg %p90
      %p248 = pneg %p114
      %p249 = pneg %p111
      %p250 = pneg %p135
      %p251 = pneg %p132
      %p252 = pneg %p163
      %p253 = pneg %p160
      %s254 = smul.u32 2, %s23
      %p255 = scmp.lt.s32.totalorder %s22, 1
      %s256 = scalar_select %p255, %s22, 1
      %p257 = scmp.lt.s32.totalorder %s254, 1
      %s258 = scalar_select %p257, %s254, 1
      %s259 = smul.addr %s256, 2
      %s260 = sadd.s32 %s258, %s259
      %s261 = smul.addr %s260, 8
      %s262 = scalar_lea.vmem %s5, %s261
      %p263 = pneg %p191
      %p264 = pneg %p188
      %p265 = scmp.lt.s32.totalorder %s22, 1
      %s266 = scalar_select %p265, %s22, 1
      %p267 = scmp.lt.s32.totalorder %s23, 0
      %s268 = scalar_select %p267, %s23, 0
      %s269 = sadd.s32 %s268, %s266
      %s270 = smul.addr %s269, 2
      %s271 = scalar_lea.vmem %s6, %s270
      %p272 = scmp.lt.s32.totalorder %s22, 1
      %s273 = scalar_select %p272, %s22, 1
      %s274 = smul.addr %s273, 2
      %s275 = smul.addr %s274, 8
      %s276 = scalar_lea.vmem %s0, %s275
      %s277 = smul.u32 2, %s23
      %p278 = scmp.lt.s32.totalorder %s22, 1
      %s279 = scalar_select %p278, %s22, 1
      %p280 = scmp.lt.s32.totalorder %s277, 1
      %s281 = scalar_select %p280, %s277, 1
      %s282 = smul.addr %s279, 2
      %s283 = sadd.s32 %s281, %s282
      %s284 = smul.addr %s283, 8
      %s285 = scalar_lea.vmem %s5, %s284
      %s286 = smul.u32 2, %s23
      %p287 = scmp.lt.s32.totalorder %s22, 1
      %s288 = scalar_select %p287, %s22, 1
      %p289 = scmp.lt.s32.totalorder %s23, 0
      %s290 = scalar_select %p289, %s23, 0
      %s291 = sadd.s32 %s290, %s288
      %s292 = smul.addr %s291, 2
      %s293 = scalar_lea.vmem %s6, %s292
      %s294 = smul.u32 %s23, 16
      %s295 = scalar_lea.vmem %s276, %s294
      %v296 = vld [vmem:[%s295] sm:$0xff]
      %v297 = vld [vmem:[%s295 + $0x8] sm:$0xff]
      %298 = vst [vmem:[#allocation2 + $0x1] sm:$0xff] %v296
      %299 = vst [vmem:[#allocation2 + $0x9] sm:$0xff] %v297
      %p300 = scmp.eq.s32.totalorder %s23, 0
      // Predicated region
      $region41: #{split_module_forward.1} parent=39 // pred_check
        %p301 = pneg %p300
      $region42: #{split_module_forward.1} parent=39 // pred_check_branch
        %303 = sbr.rel (%p301) target = $region44
      $region43: #{split_module_forward.1} parent=39 // pred_region
        %304 = vst [vmem:[#allocation2] sm:$0x1] 0.0
      $region44: #{split_module_forward.1} parent=39 // pred_fallthru
        _
      %p305 = scmp.gt.s32.totalorder %s23, 0
      // Predicated region
      $region45: #{split_module_forward.1} parent=39 // pred_check
        %p306 = pneg %p305
      $region46: #{split_module_forward.1} parent=39 // pred_check_branch
        %308 = sbr.rel (%p306) target = $region48
      $region47: #{split_module_forward.1} parent=39 // pred_region
        %s309 = ssub.s32 %s294, 1
        %s310 = scalar_lea.vmem %s276, %s309
        %v311 = vld [vmem:[%s310] sm:$0x1]
        %312 = vst [vmem:[#allocation2] sm:$0x1] %v311
      $region48: #{split_module_forward.1} parent=39 // pred_fallthru
        _
      // Predicated region
      $region49: #{split_module_forward.1} parent=39 // pred_check
        %p313 = pneg %p300
      $region50: #{split_module_forward.1} parent=39 // pred_check_branch
        %315 = sbr.rel (%p313) target = $region52
      $region51: #{split_module_forward.1} parent=39 // pred_region
        %316 = vst [vmem:[#allocation2 + $0x11] sm:$0x1] 0.0
      $region52: #{split_module_forward.1} parent=39 // pred_fallthru
        _
      %p317 = scmp.lt.s32.totalorder %s23, 0
      // Predicated region
      $region53: #{split_module_forward.1} parent=39 // pred_check
        %p318 = pneg %p317
      $region54: #{split_module_forward.1} parent=39 // pred_check_branch
        %320 = sbr.rel (%p318) target = $region56
      $region55: #{split_module_forward.1} parent=39 // pred_region
        %s321 = sadd.s32 %s294, 16
        %s322 = scalar_lea.vmem %s276, %s321
        %v323 = vld [vmem:[%s322] sm:$0x1]
        %324 = vst [vmem:[#allocation2 + $0x11] sm:$0x1] %v323
      $region56: #{split_module_forward.1} parent=39 // pred_fallthru
        _
      %v325 = vld [vmem:[#allocation2] sm:$0xff]
      %v326 = vld [vmem:[#allocation2 + $0x8] sm:$0xff]
      %v327 = vld [vmem:[%s1] sm:$0xff]
      %v328 = vld [vmem:[%s1 + $0x8] sm:$0xff]
      %v329 = vld [vmem:[%s1 + $0x10] sm:$0xff]
      %v330 = vld [vmem:[%s1 + $0x18] sm:$0xff]
      %v331 = vld [vmem:[%s1 + $0x20] sm:$0xff]
      %v332 = vld [vmem:[%s1 + $0x28] sm:$0xff]
      %v333 = vld [vmem:[%s1 + $0x30] sm:$0xff]
      %v334 = vld [vmem:[%s1 + $0x38] sm:$0xff]
      %v335 = vld [vmem:[%s1 + $0x40] sm:$0xff]
      %v336 = vld [vmem:[%s1 + $0x48] sm:$0xff]
      %v337 = vld [vmem:[%s1 + $0x50] sm:$0xff]
      %v338 = vld [vmem:[%s1 + $0x58] sm:$0xff]
      %v339 = vld [vmem:[%s1 + $0x60] sm:$0xff]
      %v340 = vld [vmem:[%s1 + $0x68] sm:$0xff]
      %v341 = vld [vmem:[%s1 + $0x70] sm:$0xff]
      %v342 = vld [vmem:[%s1 + $0x78] sm:$0xff]
      %v343 = vld [vmem:[#allocation2 + $0x1] sm:$0xff]
      %v344 = vld [vmem:[#allocation2 + $0x9] sm:$0xff]
      %s345 = scalar_lea.vmem %s1, 128
      %v346 = vld [vmem:[%s345] sm:$0xff]
      %v347 = vld [vmem:[%s345 + $0x8] sm:$0xff]
      %v348 = vld [vmem:[%s345 + $0x10] sm:$0xff]
      %v349 = vld [vmem:[%s345 + $0x18] sm:$0xff]
      %v350 = vld [vmem:[%s345 + $0x20] sm:$0xff]
      %v351 = vld [vmem:[%s345 + $0x28] sm:$0xff]
      %v352 = vld [vmem:[%s345 + $0x30] sm:$0xff]
      %v353 = vld [vmem:[%s345 + $0x38] sm:$0xff]
      %v354 = vld [vmem:[%s345 + $0x40] sm:$0xff]
      %v355 = vld [vmem:[%s345 + $0x48] sm:$0xff]
      %v356 = vld [vmem:[%s345 + $0x50] sm:$0xff]
      %v357 = vld [vmem:[%s345 + $0x58] sm:$0xff]
      %v358 = vld [vmem:[%s345 + $0x60] sm:$0xff]
      %v359 = vld [vmem:[%s345 + $0x68] sm:$0xff]
      %v360 = vld [vmem:[%s345 + $0x70] sm:$0xff]
      %v361 = vld [vmem:[%s345 + $0x78] sm:$0xff]
      %362 = vmatprep.subr.mxu0 0.0
      %363 = vmatpush1.msra.mxu0 %v361
      %364 = vmatprep.subr.mxu0 0.0
      %365 = vmatpush1.msra.mxu0 %v360
      %366 = vmatprep.subr.mxu0 0.0
      %367 = vmatpush1.msra.mxu0 %v359
      %368 = vmatprep.subr.mxu0 0.0
      %369 = vmatpush1.msra.mxu0 %v358
      %370 = vmatprep.subr.mxu0 0.0
      %371 = vmatpush1.msra.mxu0 %v357
      %372 = vmatprep.subr.mxu0 0.0
      %373 = vmatpush1.msra.mxu0 %v356
      %374 = vmatprep.subr.mxu0 0.0
      %375 = vmatpush1.msra.mxu0 %v355
      %376 = vmatprep.subr.mxu0 0.0
      %377 = vmatpush1.msra.mxu0 %v354
      %378 = vmatprep.subr.mxu0 0.0
      %379 = vmatpush1.msra.mxu0 %v353
      %380 = vmatprep.subr.mxu0 0.0
      %381 = vmatpush1.msra.mxu0 %v352
      %382 = vmatprep.subr.mxu0 0.0
      %383 = vmatpush1.msra.mxu0 %v351
      %384 = vmatprep.subr.mxu0 0.0
      %385 = vmatpush1.msra.mxu0 %v350
      %386 = vmatprep.subr.mxu0 0.0
      %387 = vmatpush1.msra.mxu0 %v349
      %388 = vmatprep.subr.mxu0 0.0
      %389 = vmatpush1.msra.mxu0 %v348
      %390 = vmatprep.subr.mxu0 0.0
      %391 = vmatpush1.msra.mxu0 %v347
      %392 = vmatprep.subr.mxu0 0.0
      %393 = vmatpush1.msra.mxu0 %v346
      %394 = vmatprep.subr.mxu0 0.0
      %395 = vmatpush2.msra.mxu0 0.0
      %396 = vmatprep.subr.mxu0 0.0
      %397 = vmatpush2.msra.mxu0 0.0
      %398 = vmatprep.subr.mxu0 0.0
      %399 = vmatpush2.msra.mxu0 0.0
      %400 = vmatprep.subr.mxu0 0.0
      %401 = vmatpush2.msra.mxu0 0.0
      %402 = vmatprep.subr.mxu0 0.0
      %403 = vmatpush2.msra.mxu0 0.0
      %404 = vmatprep.subr.mxu0 0.0
      %405 = vmatpush2.msra.mxu0 0.0
      %406 = vmatprep.subr.mxu0 0.0
      %407 = vmatpush2.msra.mxu0 0.0
      %408 = vmatprep.subr.mxu0 0.0
      %409 = vmatpush2.msra.mxu0 0.0
      %410 = vmatprep.subr.mxu0 0.0
      %411 = vmatpush2.msra.mxu0 0.0
      %412 = vmatprep.subr.mxu0 0.0
      %413 = vmatpush2.msra.mxu0 0.0
      %414 = vmatprep.subr.mxu0 0.0
      %415 = vmatpush2.msra.mxu0 0.0
      %416 = vmatprep.subr.mxu0 0.0
      %417 = vmatpush2.msra.mxu0 0.0
      %418 = vmatprep.subr.mxu0 0.0
      %419 = vmatpush2.msra.mxu0 0.0
      %420 = vmatprep.subr.mxu0 0.0
      %421 = vmatpush2.msra.mxu0 0.0
      %422 = vmatprep.subr.mxu0 0.0
      %423 = vmatpush2.msra.mxu0 0.0
      %424 = vmatprep.subr.mxu0 0.0
      %425 = vmatpush2.msra.mxu0 0.0
      %426 = vmatprep.mubr.f32.mxu0 0.0
      %427 = vmatmul.mubr.f32.gmra.mxu0 %v343
      %v428 = vpop.f32.mrf.mxu0
      %v429 = vadd.f32 0.0, %v428
      %v430 = vpop.f32.mrf.mxu0
      %431 = vmatprep.mubr.f32.mxu0 0.0
      %432 = vmatmul.mubr.f32.gmra.mxu0 %v344
      %v433 = vpop.f32.mrf.mxu0
      %v434 = vadd.f32 0.0, %v433
      %v435 = vpop.f32.mrf.mxu0
      %436 = vdwg.mxu0
      %437 = vmatprep.subr.mxu0 0.0
      %438 = vmatpush1.msra.mxu0 %v342
      %439 = vmatprep.subr.mxu0 0.0
      %440 = vmatpush1.msra.mxu0 %v341
      %441 = vmatprep.subr.mxu0 0.0
      %442 = vmatpush1.msra.mxu0 %v340
      %443 = vmatprep.subr.mxu0 0.0
      %444 = vmatpush1.msra.mxu0 %v339
      %445 = vmatprep.subr.mxu0 0.0
      %446 = vmatpush1.msra.mxu0 %v338
      %447 = vmatprep.subr.mxu0 0.0
      %448 = vmatpush1.msra.mxu0 %v337
      %449 = vmatprep.subr.mxu0 0.0
      %450 = vmatpush1.msra.mxu0 %v336
      %451 = vmatprep.subr.mxu0 0.0
      %452 = vmatpush1.msra.mxu0 %v335
      %453 = vmatprep.subr.mxu0 0.0
      %454 = vmatpush1.msra.mxu0 %v334
      %455 = vmatprep.subr.mxu0 0.0
      %456 = vmatpush1.msra.mxu0 %v333
      %457 = vmatprep.subr.mxu0 0.0
      %458 = vmatpush1.msra.mxu0 %v332
      %459 = vmatprep.subr.mxu0 0.0
      %460 = vmatpush1.msra.mxu0 %v331
      %461 = vmatprep.subr.mxu0 0.0
      %462 = vmatpush1.msra.mxu0 %v330
      %463 = vmatprep.subr.mxu0 0.0
      %464 = vmatpush1.msra.mxu0 %v329
      %465 = vmatprep.subr.mxu0 0.0
      %466 = vmatpush1.msra.mxu0 %v328
      %467 = vmatprep.subr.mxu0 0.0
      %468 = vmatpush1.msra.mxu0 %v327
      %469 = vmatprep.subr.mxu0 0.0
      %470 = vmatpush2.msra.mxu0 0.0
      %471 = vmatprep.subr.mxu0 0.0
      %472 = vmatpush2.msra.mxu0 0.0
      %473 = vmatprep.subr.mxu0 0.0
      %474 = vmatpush2.msra.mxu0 0.0
      %475 = vmatprep.subr.mxu0 0.0
      %476 = vmatpush2.msra.mxu0 0.0
      %477 = vmatprep.subr.mxu0 0.0
      %478 = vmatpush2.msra.mxu0 0.0
      %479 = vmatprep.subr.mxu0 0.0
      %480 = vmatpush2.msra.mxu0 0.0
      %481 = vmatprep.subr.mxu0 0.0
      %482 = vmatpush2.msra.mxu0 0.0
      %483 = vmatprep.subr.mxu0 0.0
      %484 = vmatpush2.msra.mxu0 0.0
      %485 = vmatprep.subr.mxu0 0.0
      %486 = vmatpush2.msra.mxu0 0.0
      %487 = vmatprep.subr.mxu0 0.0
      %488 = vmatpush2.msra.mxu0 0.0
      %489 = vmatprep.subr.mxu0 0.0
      %490 = vmatpush2.msra.mxu0 0.0
      %491 = vmatprep.subr.mxu0 0.0
      %492 = vmatpush2.msra.mxu0 0.0
      %493 = vmatprep.subr.mxu0 0.0
      %494 = vmatpush2.msra.mxu0 0.0
      %495 = vmatprep.subr.mxu0 0.0
      %496 = vmatpush2.msra.mxu0 0.0
      %497 = vmatprep.subr.mxu0 0.0
      %498 = vmatpush2.msra.mxu0 0.0
      %499 = vmatprep.subr.mxu0 0.0
      %500 = vmatpush2.msra.mxu0 0.0
      %501 = vmatprep.mubr.f32.mxu0 0.0
      %502 = vmatmul.mubr.f32.gmra.mxu0 %v325
      %v503 = vpop.f32.mrf.mxu0
      %v504 = vadd.f32 %v429, %v503
      %v505 = vpop.f32.mrf.mxu0
      %506 = vmatprep.mubr.f32.mxu0 0.0
      %507 = vmatmul.mubr.f32.gmra.mxu0 %v326
      %v508 = vpop.f32.mrf.mxu0
      %v509 = vadd.f32 %v434, %v508
      %v510 = vpop.f32.mrf.mxu0
      %511 = vdwg.mxu0
      %v512 = vld [vmem:[#allocation2 + $0x2] sm:$0xff]
      %v513 = vld [vmem:[#allocation2 + $0xa] sm:$0xff]
      %s514 = scalar_lea.vmem %s1, 256
      %v515 = vld [vmem:[%s514] sm:$0xff]
      %v516 = vld [vmem:[%s514 + $0x8] sm:$0xff]
      %v517 = vld [vmem:[%s514 + $0x10] sm:$0xff]
      %v518 = vld [vmem:[%s514 + $0x18] sm:$0xff]
      %v519 = vld [vmem:[%s514 + $0x20] sm:$0xff]
      %v520 = vld [vmem:[%s514 + $0x28] sm:$0xff]
      %v521 = vld [vmem:[%s514 + $0x30] sm:$0xff]
      %v522 = vld [vmem:[%s514 + $0x38] sm:$0xff]
      %v523 = vld [vmem:[%s514 + $0x40] sm:$0xff]
      %v524 = vld [vmem:[%s514 + $0x48] sm:$0xff]
      %v525 = vld [vmem:[%s514 + $0x50] sm:$0xff]
      %v526 = vld [vmem:[%s514 + $0x58] sm:$0xff]
      %v527 = vld [vmem:[%s514 + $0x60] sm:$0xff]
      %v528 = vld [vmem:[%s514 + $0x68] sm:$0xff]
      %v529 = vld [vmem:[%s514 + $0x70] sm:$0xff]
      %v530 = vld [vmem:[%s514 + $0x78] sm:$0xff]
      %531 = vmatprep.subr.mxu0 0.0
      %532 = vmatpush1.msra.mxu0 %v530
      %533 = vmatprep.subr.mxu0 0.0
      %534 = vmatpush1.msra.mxu0 %v529
      %535 = vmatprep.subr.mxu0 0.0
      %536 = vmatpush1.msra.mxu0 %v528
      %537 = vmatprep.subr.mxu0 0.0
      %538 = vmatpush1.msra.mxu0 %v527
      %539 = vmatprep.subr.mxu0 0.0
      %540 = vmatpush1.msra.mxu0 %v526
      %541 = vmatprep.subr.mxu0 0.0
      %542 = vmatpush1.msra.mxu0 %v525
      %543 = vmatprep.subr.mxu0 0.0
      %544 = vmatpush1.msra.mxu0 %v524
      %545 = vmatprep.subr.mxu0 0.0
      %546 = vmatpush1.msra.mxu0 %v523
      %547 = vmatprep.subr.mxu0 0.0
      %548 = vmatpush1.msra.mxu0 %v522
      %549 = vmatprep.subr.mxu0 0.0
      %550 = vmatpush1.msra.mxu0 %v521
      %551 = vmatprep.subr.mxu0 0.0
      %552 = vmatpush1.msra.mxu0 %v520
      %553 = vmatprep.subr.mxu0 0.0
      %554 = vmatpush1.msra.mxu0 %v519
      %555 = vmatprep.subr.mxu0 0.0
      %556 = vmatpush1.msra.mxu0 %v518
      %557 = vmatprep.subr.mxu0 0.0
      %558 = vmatpush1.msra.mxu0 %v517
      %559 = vmatprep.subr.mxu0 0.0
      %560 = vmatpush1.msra.mxu0 %v516
      %561 = vmatprep.subr.mxu0 0.0
      %562 = vmatpush1.msra.mxu0 %v515
      %563 = vmatprep.subr.mxu0 0.0
      %564 = vmatpush2.msra.mxu0 0.0
      %565 = vmatprep.subr.mxu0 0.0
      %566 = vmatpush2.msra.mxu0 0.0
      %567 = vmatprep.subr.mxu0 0.0
      %568 = vmatpush2.msra.mxu0 0.0
      %569 = vmatprep.subr.mxu0 0.0
      %570 = vmatpush2.msra.mxu0 0.0
      %571 = vmatprep.subr.mxu0 0.0
      %572 = vmatpush2.msra.mxu0 0.0
      %573 = vmatprep.subr.mxu0 0.0
      %574 = vmatpush2.msra.mxu0 0.0
      %575 = vmatprep.subr.mxu0 0.0
      %576 = vmatpush2.msra.mxu0 0.0
      %577 = vmatprep.subr.mxu0 0.0
      %578 = vmatpush2.msra.mxu0 0.0
      %579 = vmatprep.subr.mxu0 0.0
      %580 = vmatpush2.msra.mxu0 0.0
      %581 = vmatprep.subr.mxu0 0.0
      %582 = vmatpush2.msra.mxu0 0.0
      %583 = vmatprep.subr.mxu0 0.0
      %584 = vmatpush2.msra.mxu0 0.0
      %585 = vmatprep.subr.mxu0 0.0
      %586 = vmatpush2.msra.mxu0 0.0
      %587 = vmatprep.subr.mxu0 0.0
      %588 = vmatpush2.msra.mxu0 0.0
      %589 = vmatprep.subr.mxu0 0.0
      %590 = vmatpush2.msra.mxu0 0.0
      %591 = vmatprep.subr.mxu0 0.0
      %592 = vmatpush2.msra.mxu0 0.0
      %593 = vmatprep.subr.mxu0 0.0
      %594 = vmatpush2.msra.mxu0 0.0
      %595 = vmatprep.mubr.f32.mxu0 0.0
      %596 = vmatmul.mubr.f32.gmra.mxu0 %v512
      %v597 = vpop.f32.mrf.mxu0
      %v598 = vadd.f32 0.0, %v597
      %v599 = vpop.f32.mrf.mxu0
      %600 = vmatprep.mubr.f32.mxu0 0.0
      %601 = vmatmul.mubr.f32.gmra.mxu0 %v513
      %v602 = vpop.f32.mrf.mxu0
      %v603 = vadd.f32 0.0, %v602
      %v604 = vpop.f32.mrf.mxu0
      %605 = vdwg.mxu0
      %v606 = vadd.f32 %v504, %v598
      %v607 = vadd.f32 %v509, %v603
      %v608 = vld [vmem:[%s2] sm:$0x1]
      %v610 = vlaneseq
      %v611 = vshrl.u32 %v610, 7
      %v612 = vsub.s32 0, %v611
      %v613 = vrot.slane %v608, %v612
      %v615 = vadd.f32 %v606, %v613
      %v616 = vadd.f32 %v607, %v613
      %v617 = vld [vmem:[%s3] sm:$0xff]
      %v618 = vld [vmem:[%s3 + $0x8] sm:$0xff]
      %v619 = vld [vmem:[%s3 + $0x10] sm:$0xff]
      %v620 = vld [vmem:[%s3 + $0x18] sm:$0xff]
      %v621 = vld [vmem:[%s3 + $0x20] sm:$0xff]
      %v622 = vld [vmem:[%s3 + $0x28] sm:$0xff]
      %v623 = vld [vmem:[%s3 + $0x30] sm:$0xff]
      %v624 = vld [vmem:[%s3 + $0x38] sm:$0xff]
      %v625 = vld [vmem:[%s3 + $0x40] sm:$0xff]
      %v626 = vld [vmem:[%s3 + $0x48] sm:$0xff]
      %v627 = vld [vmem:[%s3 + $0x50] sm:$0xff]
      %v628 = vld [vmem:[%s3 + $0x58] sm:$0xff]
      %v629 = vld [vmem:[%s3 + $0x60] sm:$0xff]
      %v630 = vld [vmem:[%s3 + $0x68] sm:$0xff]
      %v631 = vld [vmem:[%s3 + $0x70] sm:$0xff]
      %v632 = vld [vmem:[%s3 + $0x78] sm:$0xff]
      %v633 = vld [vmem:[%s4] sm:$0x1]
      %v635 = vlaneseq
      %v636 = vshrl.u32 %v635, 7
      %v637 = vsub.s32 0, %v636
      %v638 = vrot.slane %v633, %v637
      %640 = vmatprep.subr.mxu0 0.0
      %641 = vmatpush1.msra.mxu0 %v632
      %642 = vmatprep.subr.mxu0 0.0
      %643 = vmatpush1.msra.mxu0 %v631
      %644 = vmatprep.subr.mxu0 0.0
      %645 = vmatpush1.msra.mxu0 %v630
      %646 = vmatprep.subr.mxu0 0.0
      %647 = vmatpush1.msra.mxu0 %v629
      %648 = vmatprep.subr.mxu0 0.0
      %649 = vmatpush1.msra.mxu0 %v628
      %650 = vmatprep.subr.mxu0 0.0
      %651 = vmatpush1.msra.mxu0 %v627
      %652 = vmatprep.subr.mxu0 0.0
      %653 = vmatpush1.msra.mxu0 %v626
      %654 = vmatprep.subr.mxu0 0.0
      %655 = vmatpush1.msra.mxu0 %v625
      %656 = vmatprep.subr.mxu0 0.0
      %657 = vmatpush1.msra.mxu0 %v624
      %658 = vmatprep.subr.mxu0 0.0
      %659 = vmatpush1.msra.mxu0 %v623
      %660 = vmatprep.subr.mxu0 0.0
      %661 = vmatpush1.msra.mxu0 %v622
      %662 = vmatprep.subr.mxu0 0.0
      %663 = vmatpush1.msra.mxu0 %v621
      %664 = vmatprep.subr.mxu0 0.0
      %665 = vmatpush1.msra.mxu0 %v620
      %666 = vmatprep.subr.mxu0 0.0
      %667 = vmatpush1.msra.mxu0 %v619
      %668 = vmatprep.subr.mxu0 0.0
      %669 = vmatpush1.msra.mxu0 %v618
      %670 = vmatprep.subr.mxu0 0.0
      %671 = vmatpush1.msra.mxu0 %v617
      %672 = vmatprep.subr.mxu0 0.0
      %673 = vmatpush2.msra.mxu0 0.0
      %674 = vmatprep.subr.mxu0 0.0
      %675 = vmatpush2.msra.mxu0 0.0
      %676 = vmatprep.subr.mxu0 0.0
      %677 = vmatpush2.msra.mxu0 0.0
      %678 = vmatprep.subr.mxu0 0.0
      %679 = vmatpush2.msra.mxu0 0.0
      %680 = vmatprep.subr.mxu0 0.0
      %681 = vmatpush2.msra.mxu0 0.0
      %682 = vmatprep.subr.mxu0 0.0
      %683 = vmatpush2.msra.mxu0 0.0
      %684 = vmatprep.subr.mxu0 0.0
      %685 = vmatpush2.msra.mxu0 0.0
      %686 = vmatprep.subr.mxu0 0.0
      %687 = vmatpush2.msra.mxu0 0.0
      %688 = vmatprep.subr.mxu0 0.0
      %689 = vmatpush2.msra.mxu0 0.0
      %690 = vmatprep.subr.mxu0 0.0
      %691 = vmatpush2.msra.mxu0 0.0
      %692 = vmatprep.subr.mxu0 0.0
      %693 = vmatpush2.msra.mxu0 0.0
      %694 = vmatprep.subr.mxu0 0.0
      %695 = vmatpush2.msra.mxu0 0.0
      %696 = vmatprep.subr.mxu0 0.0
      %697 = vmatpush2.msra.mxu0 0.0
      %698 = vmatprep.subr.mxu0 0.0
      %699 = vmatpush2.msra.mxu0 0.0
      %700 = vmatprep.subr.mxu0 0.0
      %701 = vmatpush2.msra.mxu0 0.0
      %702 = vmatprep.subr.mxu0 0.0
      %703 = vmatpush2.msra.mxu0 0.0
      %704 = vmatprep.mubr.f32.mxu0 0.0
      %705 = vmatmul.mubr.f32.gmra.mxu0 %v615
      %v706 = vpop.f32.mrf.mxu0
      %v707 = vadd.f32 %v638, %v706
      %v708 = vpop.f32.mrf.mxu0
      %709 = vmatprep.mubr.f32.mxu0 0.0
      %710 = vmatmul.mubr.f32.gmra.mxu0 %v616
      %v711 = vpop.f32.mrf.mxu0
      %v712 = vadd.f32 %v638, %v711
      %v713 = vpop.f32.mrf.mxu0
      %714 = vdwg.mxu0
      %715 = vst [vmem:[%s285] sm:$0xff] %v707
      %716 = vst [vmem:[%s285 + $0x8] sm:$0xff] %v712
      %v717 = vadd.f32 %v707, %v712
      %v718 = vrot.slane %v717, 4
      %v719 = vadd.f32 %v717, %v718
      %v720 = vrot.slane %v719, 2
      %v721 = vadd.f32 %v719, %v720
      %v722 = vrot.slane %v721, 1
      %v723 = vadd.f32 %v721, %v722
      %724 = vst [vmem:[%s293] sm:$0x1] %v723
      %v725 = vmul.f32 %v707, %v707
      %v726 = vmul.f32 %v712, %v712
      %v727 = vadd.f32 %v725, %v726
      %v728 = vrot.slane %v727, 4
      %v729 = vadd.f32 %v727, %v728
      %v730 = vrot.slane %v729, 2
      %v731 = vadd.f32 %v729, %v730
      %v732 = vrot.slane %v731, 1
      %v733 = vadd.f32 %v731, %v732
      %734 = vst [vmem:[%s293 + $0x1] sm:$0x1] %v733
      %s735 = smul.u32 2, %s23
      %p736 = scmp.lt.s32.totalorder %s22, 1
      %s737 = scalar_select %p736, %s22, 1
      %p738 = scmp.lt.s32.totalorder %s735, 1
      %s739 = scalar_select %p738, %s735, 1
      %s740 = smul.addr %s737, 2
      %s741 = sadd.s32 %s739, %s740
      %s742 = smul.addr %s741, 8
      %s743 = scalar_lea.vmem %s5, %s742
      %p744 = scmp.lt.s32.totalorder %s22, 1
      %s745 = scalar_select %p744, %s22, 1
      %p746 = scmp.lt.s32.totalorder %s23, 0
      %s747 = scalar_select %p746, %s23, 0
      %s748 = sadd.s32 %s747, %s745
      %s749 = smul.addr %s748, 2
      %s750 = scalar_lea.vmem %s6, %s749
      // Predicated region
      $region57: #{split_module_forward.1} parent=39 // pred_check
        %p751 = pneg %p160
      $region58: #{split_module_forward.1} parent=39 // pred_check_branch
        %753 = sbr.rel (%p751) target = $region60
      $region59: #{split_module_forward.1} parent=39 // pred_region
        %s754 = smul.u32 2, %s23
      $region60: #{split_module_forward.1} parent=39 // pred_fallthru
        _
      // Predicated region
      $region61: #{split_module_forward.1} parent=39 // pred_check
        %p755 = pneg %p188
      $region62: #{split_module_forward.1} parent=39 // pred_check_branch
        %757 = sbr.rel (%p755) target = $region64
      $region63: #{split_module_forward.1} parent=39 // pred_region
        _
      $region64: #{split_module_forward.1} parent=39 // pred_fallthru
        _
    $region40: #{split_module_forward.1} parent=5 // pred_fallthru
      _
    %p758 = scmp.le.s32.totalorder 2, %s13
    // Predicated region
    $region65: #{split_module_forward.1} parent=5 // pred_check
      %p759 = pneg %p758
    $region66: #{split_module_forward.1} parent=5 // pred_check_branch
      %761 = sbr.rel (%p759) target = $region68
    $region67: #{split_module_forward.1} parent=5 // pred_region
      %s762 = ssub.s32 %s13, 2
      // Predicated region
      $region69: #{split_module_forward.1} parent=67 // pred_check
        %p763 = pneg %p166
      $region70: #{split_module_forward.1} parent=67 // pred_check_branch
        %765 = sbr.rel (%p763) target = $region72
      $region71: #{split_module_forward.1} parent=67 // pred_region
        %s766 = smul.u32 2, %s25
        %p767 = scmp.lt.s32.totalorder %s24, 1
        %s768 = scalar_select %p767, %s24, 1
        %p769 = scmp.lt.s32.totalorder %s766, 1
        %s770 = scalar_select %p769, %s766, 1
        %s771 = smul.addr %s768, 2
        %s772 = sadd.s32 %s770, %s771
        %s773 = smul.addr %s772, 8
        %s774 = scalar_lea.vmem %s5, %s773
      $region72: #{split_module_forward.1} parent=67 // pred_fallthru
        _
      // Predicated region
      $region73: #{split_module_forward.1} parent=67 // pred_check
        %p775 = pneg %p194
      $region74: #{split_module_forward.1} parent=67 // pred_check_branch
        %777 = sbr.rel (%p775) target = $region76
      $region75: #{split_module_forward.1} parent=67 // pred_region
        %p778 = scmp.lt.s32.totalorder %s24, 1
        %s779 = scalar_select %p778, %s24, 1
        %p780 = scmp.lt.s32.totalorder %s25, 0
        %s781 = scalar_select %p780, %s25, 0
        %s782 = sadd.s32 %s781, %s779
        %s783 = smul.addr %s782, 2
        %s784 = scalar_lea.vmem %s6, %s783
      $region76: #{split_module_forward.1} parent=67 // pred_fallthru
        _
    $region68: #{split_module_forward.1} parent=5 // pred_fallthru
      _
  $region6: #{split_module_forward.1} parent=0 // loop_footer
    %s17 = sadd.s32 1, %s13
  $region7: #{split_module_forward.1} parent=0 // loop_footer_branch
    %12 = sbr.rel target = $region3
  $region8: #{split_module_forward.1} parent=0 // loop_exit
    _

</llo_original>
